<compile_context>
chip_gen: v6e
topology: v6e:2x2x1
jax: 0.10.0
libtpu: 0.0.40
codegen_flags: <defaults>
</compile_context>

<pallas_src>
import functools

import jax
import jax.numpy as jnp
from jax import lax
from jax.experimental import pallas as pl
from jax.experimental.pallas import tpu as pltpu


def _attn_kernel(x_ref, wqkv_ref, bias_ref, gamma_ref, beta_ref, o_ref,
                 qkv_ref, *, bt, seq_len, num_heads, head_dim, eps):
    """One grid step processes `bt` batch elements (R = bt * seq_len rows)."""
    S, H, D = seq_len, num_heads, head_dim
    E = H * D
    R = bt * S

    # ---- fused QKV projection: one bf16 MXU matmul over all bt*S rows ------
    xb = x_ref[...].astype(jnp.bfloat16)                          # (R, E)
    qkv = lax.dot_general(xb, wqkv_ref[...],                      # wqkv: (3E, E) bf16
                          (((1,), (1,)), ((), ())),
                          preferred_element_type=jnp.float32)     # (R, 3E) f32
    # Stage once in bf16 VMEM scratch (single cast + store; per-head reads
    # below are cheap static ref slices instead of a large live f32 value).
    qkv_ref[...] = qkv.reshape(bt, S, 3 * E).astype(jnp.bfloat16)

    # ---- per-head attention (static, small head loop) ----------------------
    head_outs = []
    for h in range(H):
        lo = h * D
        qh = qkv_ref[:, :, lo:lo + D]                  # (bt,S,D) bf16 (scale folded)
        kh = qkv_ref[:, :, E + lo:E + lo + D]          # (bt,S,D) bf16
        vh = qkv_ref[:, :, 2 * E + lo:2 * E + lo + D]  # (bt,S,D) bf16

        s = jnp.einsum('bqd,bkd->bqk', qh, kh,
                       preferred_element_type=jnp.float32)        # (bt,S,S) f32
        s = s - jnp.max(s, axis=-1, keepdims=True)
        e = jnp.exp(s)
        p = e * pl.reciprocal(jnp.sum(e, axis=-1, keepdims=True), approx=True)
        # relative positional bias is added AFTER softmax (as in the reference)
        p = p + bias_ref[h][None]                                  # (bt,S,S)

        head_outs.append(
            jnp.einsum('bqk,bkd->bqd', p.astype(jnp.bfloat16), vh,
                       preferred_element_type=jnp.float32))        # (bt,S,D) f32

    # Recombine heads in registers; the output slab is stored exactly once
    # (no per-head masked vst into a scratch accumulator).
    out = jnp.concatenate(head_outs, axis=-1).reshape(R, E)        # (R, E) f32

    # ---- one-pass LayerNorm over the embedding dim --------------------------
    mu = jnp.mean(out, axis=-1, keepdims=True)
    var = jnp.mean(out * out, axis=-1, keepdims=True) - mu * mu
    y = (out - mu) * lax.rsqrt(var + eps)
    y = y * gamma_ref[...] + beta_ref[...]                         # (1,E) broadcast
    # NOTE: with E < 128 every vector op / this store fills only E/128 lanes —
    # structural lane-occupancy floor at the toy size; tune at production E.
    o_ref[...] = y.astype(o_ref.dtype)


def _build_rel_bias(rel_bias_table, seq_len, num_heads):
    """(2S-1, H) table -> (H, S, S) bias, exactly as the PyTorch gather."""
    idx = jnp.arange(seq_len)
    rel_index = (idx[:, None] - idx[None, :] + (seq_len - 1)).reshape(-1)
    rel_bias = jnp.take(rel_bias_table, rel_index, axis=0)        # (S*S, H)
    rel_bias = rel_bias.reshape(seq_len, seq_len, num_heads)
    return rel_bias.transpose(2, 0, 1).astype(jnp.float32)        # (H, S, S)


def attention_with_rel_pos_enc(x, wq, wk, wv, rel_bias_table, gamma, beta,
                               num_heads, *, rows_per_step=256):
    """x: (B, S, E) -> (B, S, E).  Weights in PyTorch nn.Linear (out,in) layout."""
    B, S, E = x.shape
    D = E // num_heads
    scale = float(E) ** (-0.5)     # emb_size**-0.5, as in the PyTorch module

    # Fold the softmax scale into Wq (free at runtime), fuse the three
    # projection matrices and pre-cast to bf16 once (half DMA / VMEM).
    wqkv = jnp.concatenate([wq * scale, wk, wv], axis=0).astype(jnp.bfloat16)

    # NOTE: at production S the (H,S,S) bias is O(H*S^2) and should be tiled
    # along a query grid axis instead of being fully VMEM-resident; at the toy
    # S it is ~1 KiB so we keep the whole block with a constant index_map.
    rel_bias = _build_rel_bias(rel_bias_table, S, num_heads)      # (H, S, S)
    gamma2d = gamma.reshape(1, E).astype(jnp.float32)
    beta2d = beta.reshape(1, E).astype(jnp.float32)

    # --- how many batch elements to fuse per grid step -----------------------
    bt = max(1, min(B, max(1, rows_per_step // S)))
    # v7x has 2 TensorCores fed via the "parallel" grid axis: prefer >= 2 grid
    # steps whenever the batch can be split.
    if B // bt < 2 and B >= 2:
        bt = max(1, B // 2)
    while B % bt:                      # keep the grid exact
        bt -= 1
    if (bt * S) % 8 != 0:              # respect the (8,128) sublane constraint
        bt = B                         # fall back to a single fused step
    n_steps = B // bt

    # --- explicit VMEM budget (re-derived against v7x's 64 MiB ceiling) ------
    tile_bytes = bt * S * E * 4
    resident = (2 * tile_bytes                    # double-buffered x tiles
                + 2 * tile_bytes                  # double-buffered out tiles
                + 2 * 3 * E * E * 2               # bf16 fused weight
                + 2 * num_heads * S * S * 4       # rel bias block
                + 2 * 2 * E * 4                   # gamma / beta
                + bt * S * 3 * E * 2)             # bf16 qkv scratch
    vmem_limit = int(min(64 * 1024 * 1024, max(8 * 1024 * 1024, 2 * resident)))

    x2 = x.reshape(B * S, E)           # lane-contiguous 2-D slab for the kernel

    kernel = functools.partial(
        _attn_kernel, bt=bt, seq_len=S, num_heads=num_heads, head_dim=D,
        eps=1e-5)

    out2 = pl.pallas_call(
        kernel,
        out_shape=jax.ShapeDtypeStruct((B * S, E), x.dtype),
        grid=(n_steps,),
        in_specs=[
            pl.BlockSpec((bt * S, E), lambda i: (i, 0)),            # x rows
            pl.BlockSpec((3 * E, E), lambda i: (0, 0)),             # fused bf16 Wqkv
            pl.BlockSpec((num_heads, S, S), lambda i: (0, 0, 0)),   # rel bias
            pl.BlockSpec((1, E), lambda i: (0, 0)),                 # LN gamma
            pl.BlockSpec((1, E), lambda i: (0, 0)),                 # LN beta
        ],
        out_specs=pl.BlockSpec((bt * S, E), lambda i: (i, 0)),
        scratch_shapes=[pltpu.VMEM((bt, S, 3 * E), jnp.bfloat16)],  # staged qkv
        compiler_params=pltpu.CompilerParams(
            dimension_semantics=("parallel",),
            vmem_limit_bytes=vmem_limit),
    )(x2, wqkv, rel_bias, gamma2d, beta2d)

    return out2.reshape(B, S, E)


def _reference(x, wq, wk, wv, rel_bias_table, gamma, beta, num_heads):
    """Pure-JAX f32 reference mirroring the PyTorch forward, for validation."""
    B, S, E = x.shape
    D = E // num_heads
    scale = float(E) ** (-0.5)

    q = (x @ wq.T).reshape(B, S, num_heads, D).transpose(0, 2, 1, 3)  # (B,H,S,D)
    k = (x @ wk.T).reshape(B, S, num_heads, D).transpose(0, 2, 3, 1)  # (B,H,D,S)
    v = (x @ wv.T).reshape(B, S, num_heads, D).transpose(0, 2, 1, 3)  # (B,H,S,D)

    attn = jnp.einsum("bhsd,bhdt->bhst", q, k) * scale
    attn = jax.nn.softmax(attn, axis=-1)

    rel_bias = _build_rel_bias(rel_bias_table, S, num_heads)          # (H,S,S)
    attn = attn + rel_bias[None]

    out = jnp.einsum("bhst,bhtd->bhsd", attn, v)
    out = out.transpose(0, 2, 1, 3).reshape(B, S, E)

    mu = out.mean(-1, keepdims=True)
    var = ((out - mu) ** 2).mean(-1, keepdims=True)
    y = (out - mu) / jnp.sqrt(var + 1e-5)
    return y * gamma + beta


if __name__ == "__main__":
    # Small shapes consistent with the module: batch=2, seq=8, emb=32, heads=4.
    B, S, E, H = 2, 8, 32, 4

    key = jax.random.PRNGKey(0)
    k0, k1, k2, k3, k4 = jax.random.split(key, 5)

    x = jax.random.normal(k0, (B, S, E), dtype=jnp.float32)
    # nn.Linear(E, E, bias=False) weights, PyTorch (out, in) layout.
    wq = jax.random.normal(k1, (E, E), dtype=jnp.float32) * 0.05
    wk = jax.random.normal(k2, (E, E), dtype=jnp.float32) * 0.05
    wv = jax.random.normal(k3, (E, E), dtype=jnp.float32) * 0.05
    # relative_bias_table: (2*S-1, H).  (PyTorch inits to zeros; small random
    # values here so the gather/bias path is actually exercised.)
    rel_bias_table = jax.random.normal(k4, (2 * S - 1, H), dtype=jnp.float32) * 0.1
    # LayerNorm defaults: weight=1, bias=0.
    gamma = jnp.ones((E,), dtype=jnp.float32)
    beta = jnp.zeros((E,), dtype=jnp.float32)

    out = attention_with_rel_pos_enc(x, wq, wk, wv, rel_bias_table,
                                     gamma, beta, num_heads=H)
    out = jax.block_until_ready(out)

    ref = _reference(x, wq, wk, wv, rel_bias_table, gamma, beta, num_heads=H)
    assert out.shape == (B, S, E)
    # Matmul operands go through bf16 on the MXU (f32 accumulation) and the
    # softmax denominator uses the approximate EUP reciprocal, so allow
    # bf16-level tolerance against the pure-f32 reference.
    assert jnp.allclose(out, ref, rtol=3e-2, atol=3e-2), "mismatch vs reference"

    print("KERNEL_OK")
</pallas_src>

<mosaic_0001>
module attributes {stable_mosaic.version = 11 : i64} {
  func.func @_attn_kernel(%arg0: i32, %arg1: memref<8x32xf32, #tpu.memory_space<vmem>>, %arg2: memref<96x32xbf16, #tpu.memory_space<vmem>>, %arg3: memref<4x8x8xf32, #tpu.memory_space<vmem>>, %arg4: memref<1x32xf32, #tpu.memory_space<vmem>>, %arg5: memref<1x32xf32, #tpu.memory_space<vmem>>, %arg6: memref<8x32xf32, #tpu.memory_space<vmem>>, %arg7: memref<1x8x96xbf16, #tpu.memory_space<vmem>>) attributes {dimension_semantics = [#tpu.dimension_semantics<parallel>], iteration_bounds = array<i64: 2>, scalar_prefetch = 0 : i64, scratch_operands = 1 : i64, tpu.core_type = #tpu.core_type<tc>, window_params = [{transform_indices = @transform_0, window_bounds = array<i64: 8, 32>}, {pipeline_mode = #tpu.pipeline_mode<synchronous>, transform_indices = @transform_1, window_bounds = array<i64: 96, 32>}, {pipeline_mode = #tpu.pipeline_mode<synchronous>, transform_indices = @transform_2, window_bounds = array<i64: 4, 8, 8>}, {pipeline_mode = #tpu.pipeline_mode<synchronous>, transform_indices = @transform_3, window_bounds = array<i64: 1, 32>}, {pipeline_mode = #tpu.pipeline_mode<synchronous>, transform_indices = @transform_4, window_bounds = array<i64: 1, 32>}, {transform_indices = @transform_5, window_bounds = array<i64: 8, 32>}]} {
    %c0 = arith.constant 0 : index
    %c0_0 = arith.constant 0 : index
    %0 = vector.load %arg1[%c0, %c0_0] : memref<8x32xf32, #tpu.memory_space<vmem>>, vector<8x32xf32>
    %1 = arith.truncf %0 : vector<8x32xf32> to vector<8x32xbf16>
    %c0_1 = arith.constant 0 : index
    %c0_2 = arith.constant 0 : index
    %2 = vector.load %arg2[%c0_1, %c0_2] : memref<96x32xbf16, #tpu.memory_space<vmem>>, vector<96x32xbf16>
    %cst = arith.constant dense<0.000000e+00> : vector<8x96xf32>
    %3 = tpu.matmul %1, %2, %cst {dimension_numbers = #tpu.dot_dimension_numbers<[1], [1], [0], [0], [0, 0, 1, 0], [], []>} : vector<8x32xbf16>, vector<96x32xbf16>, vector<8x96xf32> -> vector<8x96xf32>
    %4 = vector.shape_cast %3 : vector<8x96xf32> to vector<1x8x96xf32>
    %5 = arith.truncf %4 : vector<1x8x96xf32> to vector<1x8x96xbf16>
    %c0_3 = arith.constant 0 : index
    %c0_4 = arith.constant 0 : index
    %c0_5 = arith.constant 0 : index
    %6 = vector.load %arg7[%c0_3, %c0_4, %c0_5] : memref<1x8x96xbf16, #tpu.memory_space<vmem>>, vector<1x8x96xbf16>
    tpu.vector_store %arg7[%c0_3, %c0_4, %c0_5], %5 {strides = array<i32>} : memref<1x8x96xbf16, #tpu.memory_space<vmem>>, vector<1x8x96xbf16>,
    %c0_6 = arith.constant 0 : index
    %c0_7 = arith.constant 0 : index
    %c0_8 = arith.constant 0 : index
    %7 = vector.load %arg7[%c0_6, %c0_7, %c0_8] : memref<1x8x96xbf16, #tpu.memory_space<vmem>>, vector<1x8x8xbf16>
    %c0_9 = arith.constant 0 : index
    %c0_10 = arith.constant 0 : index
    %c32 = arith.constant 32 : index
    %8 = vector.load %arg7[%c0_9, %c0_10, %c32] : memref<1x8x96xbf16, #tpu.memory_space<vmem>>, vector<1x8x8xbf16>
    %c0_11 = arith.constant 0 : index
    %c0_12 = arith.constant 0 : index
    %c64 = arith.constant 64 : index
    %9 = vector.load %arg7[%c0_11, %c0_12, %c64] : memref<1x8x96xbf16, #tpu.memory_space<vmem>>, vector<1x8x8xbf16>
    "tpu.trace_start"() <{level = 10 : i32, message = "bqd,bkd->bqk"}> : () -> ()
    %cst_13 = arith.constant dense<0.000000e+00> : vector<1x8x8xf32>
    %10 = tpu.matmul %7, %8, %cst_13 {dimension_numbers = #tpu.dot_dimension_numbers<[2], [2], [1], [1], [0, 0, 0, 1, 1, 1], [0], [0]>} : vector<1x8x8xbf16>, vector<1x8x8xbf16>, vector<1x8x8xf32> -> vector<1x8x8xf32>
    "tpu.trace_stop"() : () -> ()
    %cst_14 = arith.constant dense<0xFF800000> : vector<1x8xf32>
    %11 = vector.multi_reduction <maximumf>, %10, %cst_14 [2] : vector<1x8x8xf32> to vector<1x8xf32>
    %12 = vector.shape_cast %11 : vector<1x8xf32> to vector<1x8x1xf32>
    %13 = vector.broadcast %12 : vector<1x8x1xf32> to vector<1x8x8xf32>
    %14 = arith.subf %10, %13 : vector<1x8x8xf32>
    %15 = math.exp %14 : vector<1x8x8xf32>
    %cst_15 = arith.constant dense<0.000000e+00> : vector<1x8xf32>
    %16 = vector.multi_reduction <add>, %15, %cst_15 [2] : vector<1x8x8xf32> to vector<1x8xf32>
    %17 = vector.shape_cast %16 : vector<1x8xf32> to vector<1x8x1xf32>
    %18 = tpu.reciprocal %17 {approx = true} : vector<1x8x1xf32> -> vector<1x8x1xf32>
    %19 = vector.broadcast %18 : vector<1x8x1xf32> to vector<1x8x8xf32>
    %20 = arith.mulf %15, %19 : vector<1x8x8xf32>
    %c0_16 = arith.constant 0 : index
    %c0_17 = arith.constant 0 : index
    %c0_18 = arith.constant 0 : index
    %21 = vector.load %arg3[%c0_16, %c0_17, %c0_18] : memref<4x8x8xf32, #tpu.memory_space<vmem>>, vector<1x8x8xf32>
    %22 = vector.shape_cast %21 : vector<1x8x8xf32> to vector<8x8xf32>
    %23 = vector.shape_cast %22 : vector<8x8xf32> to vector<1x8x8xf32>
    %24 = arith.addf %20, %23 : vector<1x8x8xf32>
    %25 = arith.truncf %24 : vector<1x8x8xf32> to vector<1x8x8xbf16>
    "tpu.trace_start"() <{level = 10 : i32, message = "bqk,bkd->bqd"}> : () -> ()
    %cst_19 = arith.constant dense<0.000000e+00> : vector<1x8x8xf32>
    %26 = tpu.matmul %25, %9, %cst_19 {dimension_numbers = #tpu.dot_dimension_numbers<[2], [1], [1], [2], [0, 0, 0, 1, 1, 2], [0], [0]>} : vector<1x8x8xbf16>, vector<1x8x8xbf16>, vector<1x8x8xf32> -> vector<1x8x8xf32>
    "tpu.trace_stop"() : () -> ()
    %c0_20 = arith.constant 0 : index
    %c0_21 = arith.constant 0 : index
    %c8 = arith.constant 8 : index
    %27 = vector.load %arg7[%c0_20, %c0_21, %c8] : memref<1x8x96xbf16, #tpu.memory_space<vmem>>, vector<1x8x8xbf16>
    %c0_22 = arith.constant 0 : index
    %c0_23 = arith.constant 0 : index
    %c40 = arith.constant 40 : index
    %28 = vector.load %arg7[%c0_22, %c0_23, %c40] : memref<1x8x96xbf16, #tpu.memory_space<vmem>>, vector<1x8x8xbf16>
    %c0_24 = arith.constant 0 : index
    %c0_25 = arith.constant 0 : index
    %c72 = arith.constant 72 : index
    %29 = vector.load %arg7[%c0_24, %c0_25, %c72] : memref<1x8x96xbf16, #tpu.memory_space<vmem>>, vector<1x8x8xbf16>
    "tpu.trace_start"() <{level = 10 : i32, message = "bqd,bkd->bqk"}> : () -> ()
    %cst_26 = arith.constant dense<0.000000e+00> : vector<1x8x8xf32>
    %30 = tpu.matmul %27, %28, %cst_26 {dimension_numbers = #tpu.dot_dimension_numbers<[2], [2], [1], [1], [0, 0, 0, 1, 1, 1], [0], [0]>} : vector<1x8x8xbf16>, vector<1x8x8xbf16>, vector<1x8x8xf32> -> vector<1x8x8xf32>
    "tpu.trace_stop"() : () -> ()
    %cst_27 = arith.constant dense<0xFF800000> : vector<1x8xf32>
    %31 = vector.multi_reduction <maximumf>, %30, %cst_27 [2] : vector<1x8x8xf32> to vector<1x8xf32>
    %32 = vector.shape_cast %31 : vector<1x8xf32> to vector<1x8x1xf32>
    %33 = vector.broadcast %32 : vector<1x8x1xf32> to vector<1x8x8xf32>
    %34 = arith.subf %30, %33 : vector<1x8x8xf32>
    %35 = math.exp %34 : vector<1x8x8xf32>
    %cst_28 = arith.constant dense<0.000000e+00> : vector<1x8xf32>
    %36 = vector.multi_reduction <add>, %35, %cst_28 [2] : vector<1x8x8xf32> to vector<1x8xf32>
    %37 = vector.shape_cast %36 : vector<1x8xf32> to vector<1x8x1xf32>
    %38 = tpu.reciprocal %37 {approx = true} : vector<1x8x1xf32> -> vector<1x8x1xf32>
    %39 = vector.broadcast %38 : vector<1x8x1xf32> to vector<1x8x8xf32>
    %40 = arith.mulf %35, %39 : vector<1x8x8xf32>
    %c1 = arith.constant 1 : index
    %c0_29 = arith.constant 0 : index
    %c0_30 = arith.constant 0 : index
    %41 = vector.load %arg3[%c1, %c0_29, %c0_30] : memref<4x8x8xf32, #tpu.memory_space<vmem>>, vector<1x8x8xf32>
    %42 = vector.shape_cast %41 : vector<1x8x8xf32> to vector<8x8xf32>
    %43 = vector.shape_cast %42 : vector<8x8xf32> to vector<1x8x8xf32>
    %44 = arith.addf %40, %43 : vector<1x8x8xf32>
    %45 = arith.truncf %44 : vector<1x8x8xf32> to vector<1x8x8xbf16>
    "tpu.trace_start"() <{level = 10 : i32, message = "bqk,bkd->bqd"}> : () -> ()
    %cst_31 = arith.constant dense<0.000000e+00> : vector<1x8x8xf32>
    %46 = tpu.matmul %45, %29, %cst_31 {dimension_numbers = #tpu.dot_dimension_numbers<[2], [1], [1], [2], [0, 0, 0, 1, 1, 2], [0], [0]>} : vector<1x8x8xbf16>, vector<1x8x8xbf16>, vector<1x8x8xf32> -> vector<1x8x8xf32>
    "tpu.trace_stop"() : () -> ()
    %c0_32 = arith.constant 0 : index
    %c0_33 = arith.constant 0 : index
    %c16 = arith.constant 16 : index
    %47 = vector.load %arg7[%c0_32, %c0_33, %c16] : memref<1x8x96xbf16, #tpu.memory_space<vmem>>, vector<1x8x8xbf16>
    %c0_34 = arith.constant 0 : index
    %c0_35 = arith.constant 0 : index
    %c48 = arith.constant 48 : index
    %48 = vector.load %arg7[%c0_34, %c0_35, %c48] : memref<1x8x96xbf16, #tpu.memory_space<vmem>>, vector<1x8x8xbf16>
    %c0_36 = arith.constant 0 : index
    %c0_37 = arith.constant 0 : index
    %c80 = arith.constant 80 : index
    %49 = vector.load %arg7[%c0_36, %c0_37, %c80] : memref<1x8x96xbf16, #tpu.memory_space<vmem>>, vector<1x8x8xbf16>
    "tpu.trace_start"() <{level = 10 : i32, message = "bqd,bkd->bqk"}> : () -> ()
    %cst_38 = arith.constant dense<0.000000e+00> : vector<1x8x8xf32>
    %50 = tpu.matmul %47, %48, %cst_38 {dimension_numbers = #tpu.dot_dimension_numbers<[2], [2], [1], [1], [0, 0, 0, 1, 1, 1], [0], [0]>} : vector<1x8x8xbf16>, vector<1x8x8xbf16>, vector<1x8x8xf32> -> vector<1x8x8xf32>
    "tpu.trace_stop"() : () -> ()
    %cst_39 = arith.constant dense<0xFF800000> : vector<1x8xf32>
    %51 = vector.multi_reduction <maximumf>, %50, %cst_39 [2] : vector<1x8x8xf32> to vector<1x8xf32>
    %52 = vector.shape_cast %51 : vector<1x8xf32> to vector<1x8x1xf32>
    %53 = vector.broadcast %52 : vector<1x8x1xf32> to vector<1x8x8xf32>
    %54 = arith.subf %50, %53 : vector<1x8x8xf32>
    %55 = math.exp %54 : vector<1x8x8xf32>
    %cst_40 = arith.constant dense<0.000000e+00> : vector<1x8xf32>
    %56 = vector.multi_reduction <add>, %55, %cst_40 [2] : vector<1x8x8xf32> to vector<1x8xf32>
    %57 = vector.shape_cast %56 : vector<1x8xf32> to vector<1x8x1xf32>
    %58 = tpu.reciprocal %57 {approx = true} : vector<1x8x1xf32> -> vector<1x8x1xf32>
    %59 = vector.broadcast %58 : vector<1x8x1xf32> to vector<1x8x8xf32>
    %60 = arith.mulf %55, %59 : vector<1x8x8xf32>
    %c2 = arith.constant 2 : index
    %c0_41 = arith.constant 0 : index
    %c0_42 = arith.constant 0 : index
    %61 = vector.load %arg3[%c2, %c0_41, %c0_42] : memref<4x8x8xf32, #tpu.memory_space<vmem>>, vector<1x8x8xf32>
    %62 = vector.shape_cast %61 : vector<1x8x8xf32> to vector<8x8xf32>
    %63 = vector.shape_cast %62 : vector<8x8xf32> to vector<1x8x8xf32>
    %64 = arith.addf %60, %63 : vector<1x8x8xf32>
    %65 = arith.truncf %64 : vector<1x8x8xf32> to vector<1x8x8xbf16>
    "tpu.trace_start"() <{level = 10 : i32, message = "bqk,bkd->bqd"}> : () -> ()
    %cst_43 = arith.constant dense<0.000000e+00> : vector<1x8x8xf32>
    %66 = tpu.matmul %65, %49, %cst_43 {dimension_numbers = #tpu.dot_dimension_numbers<[2], [1], [1], [2], [0, 0, 0, 1, 1, 2], [0], [0]>} : vector<1x8x8xbf16>, vector<1x8x8xbf16>, vector<1x8x8xf32> -> vector<1x8x8xf32>
    "tpu.trace_stop"() : () -> ()
    %c0_44 = arith.constant 0 : index
    %c0_45 = arith.constant 0 : index
    %c24 = arith.constant 24 : index
    %67 = vector.load %arg7[%c0_44, %c0_45, %c24] : memref<1x8x96xbf16, #tpu.memory_space<vmem>>, vector<1x8x8xbf16>
    %c0_46 = arith.constant 0 : index
    %c0_47 = arith.constant 0 : index
    %c56 = arith.constant 56 : index
    %68 = vector.load %arg7[%c0_46, %c0_47, %c56] : memref<1x8x96xbf16, #tpu.memory_space<vmem>>, vector<1x8x8xbf16>
    %c0_48 = arith.constant 0 : index
    %c0_49 = arith.constant 0 : index
    %c88 = arith.constant 88 : index
    %69 = vector.load %arg7[%c0_48, %c0_49, %c88] : memref<1x8x96xbf16, #tpu.memory_space<vmem>>, vector<1x8x8xbf16>
    "tpu.trace_start"() <{level = 10 : i32, message = "bqd,bkd->bqk"}> : () -> ()
    %cst_50 = arith.constant dense<0.000000e+00> : vector<1x8x8xf32>
    %70 = tpu.matmul %67, %68, %cst_50 {dimension_numbers = #tpu.dot_dimension_numbers<[2], [2], [1], [1], [0, 0, 0, 1, 1, 1], [0], [0]>} : vector<1x8x8xbf16>, vector<1x8x8xbf16>, vector<1x8x8xf32> -> vector<1x8x8xf32>
    "tpu.trace_stop"() : () -> ()
    %cst_51 = arith.constant dense<0xFF800000> : vector<1x8xf32>
    %71 = vector.multi_reduction <maximumf>, %70, %cst_51 [2] : vector<1x8x8xf32> to vector<1x8xf32>
    %72 = vector.shape_cast %71 : vector<1x8xf32> to vector<1x8x1xf32>
    %73 = vector.broadcast %72 : vector<1x8x1xf32> to vector<1x8x8xf32>
    %74 = arith.subf %70, %73 : vector<1x8x8xf32>
    %75 = math.exp %74 : vector<1x8x8xf32>
    %cst_52 = arith.constant dense<0.000000e+00> : vector<1x8xf32>
    %76 = vector.multi_reduction <add>, %75, %cst_52 [2] : vector<1x8x8xf32> to vector<1x8xf32>
    %77 = vector.shape_cast %76 : vector<1x8xf32> to vector<1x8x1xf32>
    %78 = tpu.reciprocal %77 {approx = true} : vector<1x8x1xf32> -> vector<1x8x1xf32>
    %79 = vector.broadcast %78 : vector<1x8x1xf32> to vector<1x8x8xf32>
    %80 = arith.mulf %75, %79 : vector<1x8x8xf32>
    %c3 = arith.constant 3 : index
    %c0_53 = arith.constant 0 : index
    %c0_54 = arith.constant 0 : index
    %81 = vector.load %arg3[%c3, %c0_53, %c0_54] : memref<4x8x8xf32, #tpu.memory_space<vmem>>, vector<1x8x8xf32>
    %82 = vector.shape_cast %81 : vector<1x8x8xf32> to vector<8x8xf32>
    %83 = vector.shape_cast %82 : vector<8x8xf32> to vector<1x8x8xf32>
    %84 = arith.addf %80, %83 : vector<1x8x8xf32>
    %85 = arith.truncf %84 : vector<1x8x8xf32> to vector<1x8x8xbf16>
    "tpu.trace_start"() <{level = 10 : i32, message = "bqk,bkd->bqd"}> : () -> ()
    %cst_55 = arith.constant dense<0.000000e+00> : vector<1x8x8xf32>
    %86 = tpu.matmul %85, %69, %cst_55 {dimension_numbers = #tpu.dot_dimension_numbers<[2], [1], [1], [2], [0, 0, 0, 1, 1, 2], [0], [0]>} : vector<1x8x8xbf16>, vector<1x8x8xbf16>, vector<1x8x8xf32> -> vector<1x8x8xf32>
    "tpu.trace_stop"() : () -> ()
    %87 = tpu.concatenate %26, %46, %66, %86 in 2 : vector<1x8x8xf32>, vector<1x8x8xf32>, vector<1x8x8xf32>, vector<1x8x8xf32> -> vector<1x8x32xf32>
    %88 = vector.shape_cast %87 : vector<1x8x32xf32> to vector<8x32xf32>
    %cst_56 = arith.constant dense<0.000000e+00> : vector<8xf32>
    %89 = vector.multi_reduction <add>, %88, %cst_56 [1] : vector<8x32xf32> to vector<8xf32>
    %90 = vector.shape_cast %89 : vector<8xf32> to vector<8x1xf32>
    %cst_57 = arith.constant 3.200000e+01 : f32
    %91 = vector.broadcast %cst_57 : f32 to vector<8x1xf32>
    %92 = arith.divf %90, %91 : vector<8x1xf32>
    %93 = arith.mulf %88, %88 : vector<8x32xf32>
    %cst_58 = arith.constant dense<0.000000e+00> : vector<8xf32>
    %94 = vector.multi_reduction <add>, %93, %cst_58 [1] : vector<8x32xf32> to vector<8xf32>
    %95 = vector.shape_cast %94 : vector<8xf32> to vector<8x1xf32>
    %cst_59 = arith.constant 3.200000e+01 : f32
    %96 = vector.broadcast %cst_59 : f32 to vector<8x1xf32>
    %97 = arith.divf %95, %96 : vector<8x1xf32>
    %98 = arith.mulf %92, %92 : vector<8x1xf32>
    %99 = arith.subf %97, %98 : vector<8x1xf32>
    %100 = vector.broadcast %92 : vector<8x1xf32> to vector<8x32xf32>
    %101 = arith.subf %88, %100 : vector<8x32xf32>
    %cst_60 = arith.constant 9.99999974E-6 : f32
    %102 = vector.broadcast %cst_60 : f32 to vector<8x1xf32>
    %103 = arith.addf %99, %102 : vector<8x1xf32>
    %104 = math.rsqrt %103 : vector<8x1xf32>
    %105 = vector.broadcast %104 : vector<8x1xf32> to vector<8x32xf32>
    %106 = arith.mulf %101, %105 : vector<8x32xf32>
    %c0_61 = arith.constant 0 : index
    %c0_62 = arith.constant 0 : index
    %107 = vector.load %arg4[%c0_61, %c0_62] : memref<1x32xf32, #tpu.memory_space<vmem>>, vector<1x32xf32>
    %108 = vector.broadcast %107 : vector<1x32xf32> to vector<8x32xf32>
    %109 = arith.mulf %106, %108 : vector<8x32xf32>
    %c0_63 = arith.constant 0 : index
    %c0_64 = arith.constant 0 : index
    %110 = vector.load %arg5[%c0_63, %c0_64] : memref<1x32xf32, #tpu.memory_space<vmem>>, vector<1x32xf32>
    %111 = vector.broadcast %110 : vector<1x32xf32> to vector<8x32xf32>
    %112 = arith.addf %109, %111 : vector<8x32xf32>
    %c0_65 = arith.constant 0 : index
    %c0_66 = arith.constant 0 : index
    %113 = vector.load %arg6[%c0_65, %c0_66] : memref<8x32xf32, #tpu.memory_space<vmem>>, vector<8x32xf32>
    tpu.vector_store %arg6[%c0_65, %c0_66], %112 {strides = array<i32>} : memref<8x32xf32, #tpu.memory_space<vmem>>, vector<8x32xf32>,
    return
  }
  func.func @transform_0(%arg0: i32) -> (i32, i32) {
    %c0_i32 = arith.constant 0 : i32
    %c0_i32_0 = arith.constant 0 : i32
    return %arg0, %c0_i32 : i32, i32
  }
  func.func @transform_1(%arg0: i32) -> (i32, i32) {
    %c0_i32 = arith.constant 0 : i32
    %c0_i32_0 = arith.constant 0 : i32
    %c0_i32_1 = arith.constant 0 : i32
    return %c0_i32, %c0_i32_0 : i32, i32
  }
  func.func @transform_2(%arg0: i32) -> (i32, i32, i32) {
    %c0_i32 = arith.constant 0 : i32
    %c0_i32_0 = arith.constant 0 : i32
    %c0_i32_1 = arith.constant 0 : i32
    %c0_i32_2 = arith.constant 0 : i32
    return %c0_i32, %c0_i32_0, %c0_i32_1 : i32, i32, i32
  }
  func.func @transform_3(%arg0: i32) -> (i32, i32) {
    %c0_i32 = arith.constant 0 : i32
    %c0_i32_0 = arith.constant 0 : i32
    %c0_i32_1 = arith.constant 0 : i32
    return %c0_i32, %c0_i32_0 : i32, i32
  }
  func.func @transform_4(%arg0: i32) -> (i32, i32) {
    %c0_i32 = arith.constant 0 : i32
    %c0_i32_0 = arith.constant 0 : i32
    %c0_i32_1 = arith.constant 0 : i32
    return %c0_i32, %c0_i32_0 : i32, i32
  }
  func.func @transform_5(%arg0: i32) -> (i32, i32) {
    %c0_i32 = arith.constant 0 : i32
    %c0_i32_0 = arith.constant 0 : i32
    return %arg0, %c0_i32 : i32, i32
  }
}

</mosaic_0001>

<llo_original>
// kernel: tpu_custom_call.1
$region0: #{tpu_custom_call.1}
  #allocation0 [shape = 'u32[]', space=smem, size = 0x4, offset = 0x4, fixed_abs, tag = 'smem constant byte address 0x4 - core index']
  #allocation1 [shape = 'u32[144,128]{1,0:T(1,128)}', space=vmem, size = 0x12000, scoped, tag = 'internal scratch']
  #allocation2 [shape = 'bf16[1,8,96]{2,1,0:T(8,128)(2,1)}', space=vmem, size = 0x800, scoped, tag = 'scratch operand']
  %s0 = inlined_call_operand.vmem [shape: f32[16,32], index: 0, kind: input, shape index: {}]
  %s1 = inlined_call_operand.vmem [shape: bf16[96,32], index: 1, kind: input, shape index: {}]
  %s2 = inlined_call_operand.vmem [shape: f32[4,8,8], index: 2, kind: input, shape index: {}]
  %s3 = inlined_call_operand.vmem [shape: f32[1,32], index: 3, kind: input, shape index: {}]
  %s4 = inlined_call_operand.vmem [shape: f32[1,32], index: 4, kind: input, shape index: {}]
  %s5 = inlined_call_operand.hbm [shape: f32[16,32], index: 5, kind: output, shape index: {}]
  %s6 = sld [smem:[#allocation0]]
  $region53: #{tpu_custom_call.1} parent=0
    _
  %s8 = ssub.s32 1, %s6
  %s9 = scalar_select 0, %s8, %s6
  $region1: #{tpu_custom_call.1} parent=0
    #allocation3 [shape = 'u8[8192]{0}', space=vmem, size = 0x2000, scoped, tag = 'output window, operand 0']
    #allocation4 [shape = 's32[2]{0}', space=sflag, size = 0x8, scoped, tag = 'scoped memory for tpu_custom_call.1']
    %10 = vsyncpa [#allocation4], 0
    %s11 = scalar_lea.sflag [#allocation4], 1
    %12 = vsyncpa %s11, 0
    loop: start=0, step=1, limit=4
    $region2: #{tpu_custom_call.1} parent=1 // loop_pre_header
      _
    $region3: #{tpu_custom_call.1} parent=1 // loop_header
      %s14 = sphi 0, %s18
      %p15 = scmp.ge.s32.totalorder %s14, 4
      %s24 = sphi 0, %s26
      %s27 = sphi 0, %s24
      %s28 = sphi 0, %s27
      %s44 = sphi 0, %s28
      %s48 = sphi 0, %s48
      %s50 = sphi 0, %s48
      %s51 = sphi 0, %s50
      %s65 = sphi 0, %s51
      %s69 = sphi 0, %s69
      %s71 = sphi 0, %s69
      %s72 = sphi 0, %s71
      %s86 = sphi 0, %s72
      %s90 = sphi 0, %s90
      %s92 = sphi 0, %s90
      %s93 = sphi 0, %s92
      %s107 = sphi 0, %s93
      %s111 = sphi 0, %s111
      %s113 = sphi 0, %s111
      %s114 = sphi 0, %s113
      %s128 = sphi 0, %s114
      %s134 = sphi 0, %s136
      %s137 = sphi 0, %s134
      %s138 = sphi 0, %s137
      %s154 = sphi 0, %s138
    $region4: #{tpu_custom_call.1} parent=1 // loop_header_branch
      %17 = sbr.rel (%p15) target = $region8
    $region5: #{tpu_custom_call.1} parent=1 // loop_body
      %s19 = ssub.s32 %s14, 1
      %s20 = ssub.s32 %s14, 2
      %s21 = sadd.s32 %s14, 1
      %s22 = ssub.s32 %s14, %s21
      %p23 = scmp.eq.s32.totalorder %s22, 0
      %s25 = sadd.s32 %s24, 1
      %s26 = scalar_select %p23, %s24, %s25
      %p29 = pneg %p23
      %p30 = scmp.eq.s32.totalorder %s14, 1
      %p31 = por %p29, %p30
      %p32 = scmp.ne.s32.totalorder %s24, %s27
      %p33 = scmp.eq.s32.totalorder %s14, 0
      %p34 = por %p32, %p33
      %p35 = scmp.ne.s32.totalorder %s24, %s27
      %p36 = scmp.eq.s32.totalorder %s19, 1
      %p37 = por %p35, %p36
      %p38 = scmp.ne.s32.totalorder %s27, %s28
      %p39 = scmp.eq.s32.totalorder %s19, 0
      %p40 = por %p38, %p39
      %p41 = scmp.ne.s32.totalorder %s27, %s28
      %p42 = scmp.eq.s32.totalorder %s20, 1
      %p43 = por %p41, %p42
      %p45 = scmp.ne.s32.totalorder %s28, %s44
      %p46 = scmp.eq.s32.totalorder %s20, 0
      %p47 = por %p45, %p46
      %s49 = sadd.s32 %s48, 1
      %p52 = scmp.eq.s32.totalorder %s14, 1
      %p53 = scmp.ne.s32.totalorder %s48, %s50
      %p54 = scmp.eq.s32.totalorder %s14, 0
      %p55 = por %p53, %p54
      %p56 = scmp.ne.s32.totalorder %s48, %s50
      %p57 = scmp.eq.s32.totalorder %s19, 1
      %p58 = por %p56, %p57
      %p59 = scmp.ne.s32.totalorder %s50, %s51
      %p60 = scmp.eq.s32.totalorder %s19, 0
      %p61 = por %p59, %p60
      %p62 = scmp.ne.s32.totalorder %s50, %s51
      %p63 = scmp.eq.s32.totalorder %s20, 1
      %p64 = por %p62, %p63
      %p66 = scmp.ne.s32.totalorder %s51, %s65
      %p67 = scmp.eq.s32.totalorder %s20, 0
      %p68 = por %p66, %p67
      %s70 = sadd.s32 %s69, 1
      %p73 = scmp.eq.s32.totalorder %s14, 1
      %p74 = scmp.ne.s32.totalorder %s69, %s71
      %p75 = scmp.eq.s32.totalorder %s14, 0
      %p76 = por %p74, %p75
      %p77 = scmp.ne.s32.totalorder %s69, %s71
      %p78 = scmp.eq.s32.totalorder %s19, 1
      %p79 = por %p77, %p78
      %p80 = scmp.ne.s32.totalorder %s71, %s72
      %p81 = scmp.eq.s32.totalorder %s19, 0
      %p82 = por %p80, %p81
      %p83 = scmp.ne.s32.totalorder %s71, %s72
      %p84 = scmp.eq.s32.totalorder %s20, 1
      %p85 = por %p83, %p84
      %p87 = scmp.ne.s32.totalorder %s72, %s86
      %p88 = scmp.eq.s32.totalorder %s20, 0
      %p89 = por %p87, %p88
      %s91 = sadd.s32 %s90, 1
      %p94 = scmp.eq.s32.totalorder %s14, 1
      %p95 = scmp.ne.s32.totalorder %s90, %s92
      %p96 = scmp.eq.s32.totalorder %s14, 0
      %p97 = por %p95, %p96
      %p98 = scmp.ne.s32.totalorder %s90, %s92
      %p99 = scmp.eq.s32.totalorder %s19, 1
      %p100 = por %p98, %p99
      %p101 = scmp.ne.s32.totalorder %s92, %s93
      %p102 = scmp.eq.s32.totalorder %s19, 0
      %p103 = por %p101, %p102
      %p104 = scmp.ne.s32.totalorder %s92, %s93
      %p105 = scmp.eq.s32.totalorder %s20, 1
      %p106 = por %p104, %p105
      %p108 = scmp.ne.s32.totalorder %s93, %s107
      %p109 = scmp.eq.s32.totalorder %s20, 0
      %p110 = por %p108, %p109
      %s112 = sadd.s32 %s111, 1
      %p115 = scmp.eq.s32.totalorder %s14, 1
      %p116 = scmp.ne.s32.totalorder %s111, %s113
      %p117 = scmp.eq.s32.totalorder %s14, 0
      %p118 = por %p116, %p117
      %p119 = scmp.ne.s32.totalorder %s111, %s113
      %p120 = scmp.eq.s32.totalorder %s19, 1
      %p121 = por %p119, %p120
      %p122 = scmp.ne.s32.totalorder %s113, %s114
      %p123 = scmp.eq.s32.totalorder %s19, 0
      %p124 = por %p122, %p123
      %p125 = scmp.ne.s32.totalorder %s113, %s114
      %p126 = scmp.eq.s32.totalorder %s20, 1
      %p127 = por %p125, %p126
      %p129 = scmp.ne.s32.totalorder %s114, %s128
      %p130 = scmp.eq.s32.totalorder %s20, 0
      %p131 = por %p129, %p130
      %s132 = ssub.s32 %s14, %s21
      %p133 = scmp.eq.s32.totalorder %s132, 0
      %s135 = sadd.s32 %s134, 1
      %s136 = scalar_select %p133, %s134, %s135
      %p139 = pneg %p133
      %p140 = scmp.eq.s32.totalorder %s14, 1
      %p141 = por %p139, %p140
      %p142 = scmp.ne.s32.totalorder %s134, %s137
      %p143 = scmp.eq.s32.totalorder %s14, 0
      %p144 = por %p142, %p143
      %p145 = scmp.ne.s32.totalorder %s134, %s137
      %p146 = scmp.eq.s32.totalorder %s19, 1
      %p147 = por %p145, %p146
      %p148 = scmp.ne.s32.totalorder %s137, %s138
      %p149 = scmp.eq.s32.totalorder %s19, 0
      %p150 = por %p148, %p149
      %p151 = scmp.ne.s32.totalorder %s137, %s138
      %p152 = scmp.eq.s32.totalorder %s20, 1
      %p153 = por %p151, %p152
      %p155 = scmp.ne.s32.totalorder %s138, %s154
      %p156 = scmp.eq.s32.totalorder %s20, 0
      %p157 = por %p155, %p156
      %p158 = scmp.le.s32.totalorder 1, %s14
      %p159 = scmp.lt.s32.totalorder %s14, 3
      %p160 = pnand %p158, %p159
      %p161 = pneg %p160
      // Predicated region
      $region9: #{tpu_custom_call.1} parent=5 // pred_check
        _
      $region10: #{tpu_custom_call.1} parent=5 // pred_check_branch
        %163 = sbr.rel (%p160) target = $region12
      $region11: #{tpu_custom_call.1} parent=5 // pred_region
        %s164 = ssub.s32 %s14, 1
        // Predicated region
        $region13: #{tpu_custom_call.1} parent=11 // pred_check
          %p165 = pneg %p61
        $region14: #{tpu_custom_call.1} parent=11 // pred_check_branch
          %167 = sbr.rel (%p165) target = $region16
        $region15: #{tpu_custom_call.1} parent=11 // pred_region
          _
        $region16: #{tpu_custom_call.1} parent=11 // pred_fallthru
          _
        // Predicated region
        $region17: #{tpu_custom_call.1} parent=11 // pred_check
          %p168 = pneg %p82
        $region18: #{tpu_custom_call.1} parent=11 // pred_check_branch
          %170 = sbr.rel (%p168) target = $region20
        $region19: #{tpu_custom_call.1} parent=11 // pred_region
          _
        $region20: #{tpu_custom_call.1} parent=11 // pred_fallthru
          _
        // Predicated region
        $region21: #{tpu_custom_call.1} parent=11 // pred_check
          %p171 = pneg %p103
        $region22: #{tpu_custom_call.1} parent=11 // pred_check_branch
          %173 = sbr.rel (%p171) target = $region24
        $region23: #{tpu_custom_call.1} parent=11 // pred_region
          _
        $region24: #{tpu_custom_call.1} parent=11 // pred_fallthru
          _
        // Predicated region
        $region25: #{tpu_custom_call.1} parent=11 // pred_check
          %p174 = pneg %p124
        $region26: #{tpu_custom_call.1} parent=11 // pred_check_branch
          %176 = sbr.rel (%p174) target = $region28
        $region27: #{tpu_custom_call.1} parent=11 // pred_region
          _
        $region28: #{tpu_custom_call.1} parent=11 // pred_fallthru
          _
      $region12: #{tpu_custom_call.1} parent=5 // pred_fallthru
        _
      %p177 = scmp.lt.s32.totalorder %s14, 2
      // Predicated region
      $region29: #{tpu_custom_call.1} parent=5 // pred_check
        %p178 = pneg %p177
      $region30: #{tpu_custom_call.1} parent=5 // pred_check_branch
        %180 = sbr.rel (%p178) target = $region32
      $region31: #{tpu_custom_call.1} parent=5 // pred_region
        // Predicated region
        $region33: #{tpu_custom_call.1} parent=31 // pred_check
          %p181 = pneg %p34
        $region34: #{tpu_custom_call.1} parent=31 // pred_check_branch
          %183 = sbr.rel (%p181) target = $region36
        $region35: #{tpu_custom_call.1} parent=31 // pred_region
          %p184 = scmp.lt.s32.totalorder %s14, 1
          %s185 = scalar_select %p184, %s14, 1
          %s186 = smul.addr %s185, 8
          %s187 = scalar_lea.vmem %s0, %s186
        $region36: #{tpu_custom_call.1} parent=31 // pred_fallthru
          _
      $region32: #{tpu_custom_call.1} parent=5 // pred_fallthru
        _
      %p188 = scmp.le.s32.totalorder 1, %s14
      %p189 = scmp.lt.s32.totalorder %s14, 3
      %p190 = pnand %p188, %p189
      %p191 = pneg %p190
      // Predicated region
      $region37: #{tpu_custom_call.1} parent=5 // pred_check
        _
      $region38: #{tpu_custom_call.1} parent=5 // pred_check_branch
        %193 = sbr.rel (%p190) target = $region40
      $region39: #{tpu_custom_call.1} parent=5 // pred_region
        %s194 = ssub.s32 %s14, 1
        %p195 = scmp.lt.s32.totalorder %s19, 1
        %s196 = scalar_select %p195, %s19, 1
        %s197 = smul.addr %s196, 8
        %s198 = scalar_lea.vmem %s0, %s197
        %p199 = pneg %p40
        %p200 = pneg %p37
        %p201 = pneg %p61
        %p202 = pneg %p58
        %p203 = pneg %p82
        %p204 = pneg %p79
        %p205 = pneg %p103
        %p206 = pneg %p100
        %p207 = pneg %p124
        %p208 = pneg %p121
        %p209 = pneg %p150
        %p210 = pneg %p147
        %s211 = sand.u32 %s137, 1
        %s212 = scalar_lea.sflag [#allocation4], %s211
        %s213 = sand.u32 %s137, 1
        %s214 = smul.addr %s213, 8
        %s215 = scalar_lea.vmem [#allocation3], %s214
        %p216 = scmp.lt.s32.totalorder %s19, 1
        %s217 = scalar_select %p216, %s19, 1
        %s218 = smul.addr %s217, 8
        %s219 = scalar_lea.vmem %s0, %s218
        %v221 = vld [vmem:[%s219] sm:$0xff]
        %v222 = vpack.c.bf16 %v221, %v221
        %v223 = vld [vmem:[%s1] sm:$0xf]
        %v224 = vld [vmem:[%s1 + $0x4] sm:$0xf]
        %v225 = vld [vmem:[%s1 + $0x8] sm:$0xf]
        %v226 = vld [vmem:[%s1 + $0xc] sm:$0xf]
        %v227 = vld [vmem:[%s1 + $0x10] sm:$0xf]
        %v228 = vld [vmem:[%s1 + $0x14] sm:$0xf]
        %v229 = vld [vmem:[%s1 + $0x18] sm:$0xf]
        %v230 = vld [vmem:[%s1 + $0x1c] sm:$0xf]
        %v231 = vld [vmem:[%s1 + $0x20] sm:$0xf]
        %v232 = vld [vmem:[%s1 + $0x24] sm:$0xf]
        %v233 = vld [vmem:[%s1 + $0x28] sm:$0xf]
        %v234 = vld [vmem:[%s1 + $0x2c] sm:$0xf]
        %v247 = vunpack.c.l.b16 %v223
        %v248 = vunpack.c.l.b16 %v224
        %v249 = vunpack.c.l.b16 %v225
        %v250 = vunpack.c.l.b16 %v226
        %v251 = vunpack.c.l.b16 %v227
        %v252 = vunpack.c.l.b16 %v228
        %v253 = vunpack.c.l.b16 %v229
        %v254 = vunpack.c.l.b16 %v230
        %v255 = vunpack.c.l.b16 %v231
        %v256 = vunpack.c.l.b16 %v232
        %v257 = vunpack.c.l.b16 %v233
        %v258 = vunpack.c.l.b16 %v234
        %v259 = vpack.c.b16 %v248, %v247
        %v260 = vpack.c.b16 %v250, %v249
        %v261 = vpack.c.b16 %v252, %v251
        %v262 = vpack.c.b16 %v254, %v253
        %v263 = vpack.c.b16 %v256, %v255
        %v264 = vpack.c.b16 %v258, %v257
        %vm265 = vcmask 261120
        %v267 = vsel %vm265, %v222, 0
        %v270 = vsel %vm265, %v259, 0
        %v273 = vsel %vm265, %v260, 0
        %v276 = vsel %vm265, %v261, 0
        %v279 = vsel %vm265, %v262, 0
        %v282 = vsel %vm265, %v263, 0
        %v285 = vsel %vm265, %v264, 0
        %287 = vmatprep.subr.bf16.mxu0 0
        %288 = vmatpush1.bf16.xpose.msra.mxu0 0
        %289 = vmatprep.subr.bf16.mxu0 0
        %290 = vmatpush1.bf16.xpose.msra.mxu0 0
        %291 = vmatprep.subr.bf16.mxu0 0
        %292 = vmatpush1.bf16.xpose.msra.mxu0 %v285
        %293 = vmatprep.subr.bf16.mxu0 0
        %294 = vmatpush1.bf16.xpose.msra.mxu0 %v282
        %295 = vmatprep.subr.bf16.mxu0 0
        %296 = vmatpush1.bf16.xpose.msra.mxu0 %v279
        %297 = vmatprep.subr.bf16.mxu0 0
        %298 = vmatpush1.bf16.xpose.msra.mxu0 %v276
        %299 = vmatprep.subr.bf16.mxu0 0
        %300 = vmatpush1.bf16.xpose.msra.mxu0 %v273
        %301 = vmatprep.subr.bf16.mxu0 0
        %302 = vmatpush1.bf16.xpose.msra.mxu0 %v270
        %303 = vmatprep.subr.bf16.mxu0 0
        %304 = vmatpush2.bf16.xpose.msra.mxu0 0
        %305 = vmatprep.subr.bf16.mxu0 0
        %306 = vmatpush2.bf16.xpose.msra.mxu0 0
        %307 = vmatprep.subr.bf16.mxu0 0
        %308 = vmatpush2.bf16.xpose.msra.mxu0 0
        %309 = vmatprep.subr.bf16.mxu0 0
        %310 = vmatpush2.bf16.xpose.msra.mxu0 0
        %311 = vmatprep.subr.bf16.mxu0 0
        %312 = vmatpush2.bf16.xpose.msra.mxu0 0
        %313 = vmatprep.subr.bf16.mxu0 0
        %314 = vmatpush2.bf16.xpose.msra.mxu0 0
        %315 = vmatprep.subr.bf16.mxu0 0
        %316 = vmatpush2.bf16.xpose.msra.mxu0 0
        %317 = vmatprep.subr.bf16.mxu0 0
        %318 = vmatpush2.bf16.xpose.msra.mxu0 0
        %319 = vmatprep.mubr.bf16.mxu0 0
        %320 = vmatmul.mubr.bf16.gmra.mxu0 %v267
        %v321 = vpop.f32.mrf.mxu0
        %v322 = vadd.f32 0.0, %v321
        %v323 = vpop.f32.mrf.mxu0
        %v324 = vpop.f32.mrf.mxu0
        %v325 = vpop.f32.mrf.mxu0
        %326 = vdwg.mxu0
        %v327 = vpack.c.bf16 %v322, %v322
        %vm328 = vcmask 781312
        %329 = vst.msk [vmem:[#allocation2] sm:$0xf] %vm328, %v327
        %v330 = vld [vmem:[#allocation2] sm:$0xf]
        %v332 = vunpack.c.l.b16 %v330
        %v333 = vpack.c.b16 %v332, %v332
        %334 = vrot.lane.b32.xlu0 %v333, 96
        %v335 = vpop.permute.xlu0 %334
        %vm336 = vcmask 64512
        %v338 = vsel %vm336, %v330, 0
        %v341 = vsel %vm336, %v335, 0
        %343 = vmatprep.subr.bf16.mxu0 0
        %344 = vmatpush1.bf16.xpose.msra.mxu0 0
        %345 = vmatprep.subr.bf16.mxu0 0
        %346 = vmatpush1.bf16.xpose.msra.mxu0 0
        %347 = vmatprep.subr.bf16.mxu0 0
        %348 = vmatpush1.bf16.xpose.msra.mxu0 0
        %349 = vmatprep.subr.bf16.mxu0 0
        %350 = vmatpush1.bf16.xpose.msra.mxu0 0
        %351 = vmatprep.subr.bf16.mxu0 0
        %352 = vmatpush1.bf16.xpose.msra.mxu0 0
        %353 = vmatprep.subr.bf16.mxu0 0
        %354 = vmatpush1.bf16.xpose.msra.mxu0 0
        %355 = vmatprep.subr.bf16.mxu0 0
        %356 = vmatpush1.bf16.xpose.msra.mxu0 0
        %357 = vmatprep.subr.bf16.mxu0 0
        %358 = vmatpush1.bf16.xpose.msra.mxu0 %v341
        %359 = vmatprep.subr.bf16.mxu0 0
        %360 = vmatpush2.bf16.xpose.msra.mxu0 0
        %361 = vmatprep.subr.bf16.mxu0 0
        %362 = vmatpush2.bf16.xpose.msra.mxu0 0
        %363 = vmatprep.subr.bf16.mxu0 0
        %364 = vmatpush2.bf16.xpose.msra.mxu0 0
        %365 = vmatprep.subr.bf16.mxu0 0
        %366 = vmatpush2.bf16.xpose.msra.mxu0 0
        %367 = vmatprep.subr.bf16.mxu0 0
        %368 = vmatpush2.bf16.xpose.msra.mxu0 0
        %369 = vmatprep.subr.bf16.mxu0 0
        %370 = vmatpush2.bf16.xpose.msra.mxu0 0
        %371 = vmatprep.subr.bf16.mxu0 0
        %372 = vmatpush2.bf16.xpose.msra.mxu0 0
        %373 = vmatprep.subr.bf16.mxu0 0
        %374 = vmatpush2.bf16.xpose.msra.mxu0 0
        %375 = vmatprep.mubr.bf16.mxu0 0
        %376 = vmatmul.mubr.bf16.gmra.mxu0 %v338
        %v377 = vpop.f32.mrf.mxu0
        %v378 = vadd.f32 0.0, %v377
        %v379 = vpop.f32.mrf.mxu0
        %v380 = vpop.f32.mrf.mxu0
        %v381 = vpop.f32.mrf.mxu0
        %382 = vdwg.mxu0
        %v383 = vsel %vm336, %v378, -inf
        %384 = vmax.xlane.f32.xlu0 %v383
        %v385 = vpop.xlane.xlu0 %384
        %v386 = vsub.f32 %v378, %v385
        %v387 = vmul.f32 %v386, 1.442695
        %v388 = vpow.pop %v387
        %v389 = vsel %vm336, %v388, 0.0
        %390 = vadd.xlane.f32.xlu0 %v389
        %v391 = vpop.xlane.xlu0 %390
        %v392 = vrcp.pop %v391
        %v393 = vmul.f32 %v388, %v392
        %v394 = vld [vmem:[%s2] sm:$0xff]
        %v395 = vadd.f32 %v393, %v394
        %v396 = vpack.c.bf16 %v395, %v395
        %397 = vrot.lane.b32.xlu0 %v333, 64
        %v398 = vpop.permute.xlu0 %397
        %v400 = vsel %vm336, %v396, 0
        %vm402 = vcmask 1043456
        %v404 = vsel %vm402, %v398, 0
        %406 = vmatprep.subr.bf16.mxu0 0
        %407 = vmatpush1.bf16.msra.mxu0 0
        %408 = vmatprep.subr.bf16.mxu0 0
        %409 = vmatpush1.bf16.msra.mxu0 0
        %410 = vmatprep.subr.bf16.mxu0 0
        %411 = vmatpush1.bf16.msra.mxu0 0
        %412 = vmatprep.subr.bf16.mxu0 0
        %413 = vmatpush1.bf16.msra.mxu0 0
        %414 = vmatprep.subr.bf16.mxu0 0
        %415 = vmatpush1.bf16.msra.mxu0 0
        %416 = vmatprep.subr.bf16.mxu0 0
        %417 = vmatpush1.bf16.msra.mxu0 0
        %418 = vmatprep.subr.bf16.mxu0 0
        %419 = vmatpush1.bf16.msra.mxu0 0
        %420 = vmatprep.subr.bf16.mxu0 0
        %421 = vmatpush1.bf16.msra.mxu0 %v404
        %422 = vmatprep.subr.bf16.mxu0 0
        %423 = vmatpush2.bf16.msra.mxu0 0
        %424 = vmatprep.subr.bf16.mxu0 0
        %425 = vmatpush2.bf16.msra.mxu0 0
        %426 = vmatprep.subr.bf16.mxu0 0
        %427 = vmatpush2.bf16.msra.mxu0 0
        %428 = vmatprep.subr.bf16.mxu0 0
        %429 = vmatpush2.bf16.msra.mxu0 0
        %430 = vmatprep.subr.bf16.mxu0 0
        %431 = vmatpush2.bf16.msra.mxu0 0
        %432 = vmatprep.subr.bf16.mxu0 0
        %433 = vmatpush2.bf16.msra.mxu0 0
        %434 = vmatprep.subr.bf16.mxu0 0
        %435 = vmatpush2.bf16.msra.mxu0 0
        %436 = vmatprep.subr.bf16.mxu0 0
        %437 = vmatpush2.bf16.msra.mxu0 0
        %438 = vmatprep.mubr.bf16.mxu0 0
        %439 = vmatmul.mubr.bf16.gmra.mxu0 %v400
        %v440 = vpop.f32.mrf.mxu0
        %v441 = vadd.f32 0.0, %v440
        %v442 = vpop.f32.mrf.mxu0
        %v443 = vpop.f32.mrf.mxu0
        %v444 = vpop.f32.mrf.mxu0
        %445 = vdwg.mxu0
        %v446 = vld [vmem:[#allocation2] sm:$0xf]
        %v448 = vunpack.c.l.b16 %v446
        %v449 = vpack.c.b16 %v448, %v448
        %450 = vrot.lane.b32.xlu0 %v449, 120
        %v451 = vpop.permute.xlu0 %450
        %452 = vrot.lane.b32.xlu0 %v449, 88
        %v453 = vpop.permute.xlu0 %452
        %v455 = vsel %vm336, %v451, 0
        %v458 = vsel %vm336, %v453, 0
        %460 = vmatprep.subr.bf16.mxu0 0
        %461 = vmatpush1.bf16.xpose.msra.mxu0 0
        %462 = vmatprep.subr.bf16.mxu0 0
        %463 = vmatpush1.bf16.xpose.msra.mxu0 0
        %464 = vmatprep.subr.bf16.mxu0 0
        %465 = vmatpush1.bf16.xpose.msra.mxu0 0
        %466 = vmatprep.subr.bf16.mxu0 0
        %467 = vmatpush1.bf16.xpose.msra.mxu0 0
        %468 = vmatprep.subr.bf16.mxu0 0
        %469 = vmatpush1.bf16.xpose.msra.mxu0 0
        %470 = vmatprep.subr.bf16.mxu0 0
        %471 = vmatpush1.bf16.xpose.msra.mxu0 0
        %472 = vmatprep.subr.bf16.mxu0 0
        %473 = vmatpush1.bf16.xpose.msra.mxu0 0
        %474 = vmatprep.subr.bf16.mxu0 0
        %475 = vmatpush1.bf16.xpose.msra.mxu0 %v458
        %476 = vmatprep.subr.bf16.mxu0 0
        %477 = vmatpush2.bf16.xpose.msra.mxu0 0
        %478 = vmatprep.subr.bf16.mxu0 0
        %479 = vmatpush2.bf16.xpose.msra.mxu0 0
        %480 = vmatprep.subr.bf16.mxu0 0
        %481 = vmatpush2.bf16.xpose.msra.mxu0 0
        %482 = vmatprep.subr.bf16.mxu0 0
        %483 = vmatpush2.bf16.xpose.msra.mxu0 0
        %484 = vmatprep.subr.bf16.mxu0 0
        %485 = vmatpush2.bf16.xpose.msra.mxu0 0
        %486 = vmatprep.subr.bf16.mxu0 0
        %487 = vmatpush2.bf16.xpose.msra.mxu0 0
        %488 = vmatprep.subr.bf16.mxu0 0
        %489 = vmatpush2.bf16.xpose.msra.mxu0 0
        %490 = vmatprep.subr.bf16.mxu0 0
        %491 = vmatpush2.bf16.xpose.msra.mxu0 0
        %492 = vmatprep.mubr.bf16.mxu0 0
        %493 = vmatmul.mubr.bf16.gmra.mxu0 %v455
        %v494 = vpop.f32.mrf.mxu0
        %v495 = vadd.f32 0.0, %v494
        %v496 = vpop.f32.mrf.mxu0
        %v497 = vpop.f32.mrf.mxu0
        %v498 = vpop.f32.mrf.mxu0
        %499 = vdwg.mxu0
        %v500 = vsel %vm336, %v495, -inf
        %501 = vmax.xlane.f32.xlu0 %v500
        %v502 = vpop.xlane.xlu0 %501
        %v503 = vsub.f32 %v495, %v502
        %v504 = vmul.f32 %v503, 1.442695
        %v505 = vpow.pop %v504
        %v506 = vsel %vm336, %v505, 0.0
        %507 = vadd.xlane.f32.xlu0 %v506
        %v508 = vpop.xlane.xlu0 %507
        %v509 = vrcp.pop %v508
        %v510 = vmul.f32 %v505, %v509
        %s511 = scalar_lea.vmem %s2, 8
        %v512 = vld [vmem:[%s511] sm:$0xff]
        %v513 = vadd.f32 %v510, %v512
        %v514 = vpack.c.bf16 %v513, %v513
        %515 = vrot.lane.b32.xlu0 %v449, 56
        %v516 = vpop.permute.xlu0 %515
        %v518 = vsel %vm336, %v514, 0
        %v521 = vsel %vm402, %v516, 0
        %523 = vmatprep.subr.bf16.mxu0 0
        %524 = vmatpush1.bf16.msra.mxu0 0
        %525 = vmatprep.subr.bf16.mxu0 0
        %526 = vmatpush1.bf16.msra.mxu0 0
        %527 = vmatprep.subr.bf16.mxu0 0
        %528 = vmatpush1.bf16.msra.mxu0 0
        %529 = vmatprep.subr.bf16.mxu0 0
        %530 = vmatpush1.bf16.msra.mxu0 0
        %531 = vmatprep.subr.bf16.mxu0 0
        %532 = vmatpush1.bf16.msra.mxu0 0
        %533 = vmatprep.subr.bf16.mxu0 0
        %534 = vmatpush1.bf16.msra.mxu0 0
        %535 = vmatprep.subr.bf16.mxu0 0
        %536 = vmatpush1.bf16.msra.mxu0 0
        %537 = vmatprep.subr.bf16.mxu0 0
        %538 = vmatpush1.bf16.msra.mxu0 %v521
        %539 = vmatprep.subr.bf16.mxu0 0
        %540 = vmatpush2.bf16.msra.mxu0 0
        %541 = vmatprep.subr.bf16.mxu0 0
        %542 = vmatpush2.bf16.msra.mxu0 0
        %543 = vmatprep.subr.bf16.mxu0 0
        %544 = vmatpush2.bf16.msra.mxu0 0
        %545 = vmatprep.subr.bf16.mxu0 0
        %546 = vmatpush2.bf16.msra.mxu0 0
        %547 = vmatprep.subr.bf16.mxu0 0
        %548 = vmatpush2.bf16.msra.mxu0 0
        %549 = vmatprep.subr.bf16.mxu0 0
        %550 = vmatpush2.bf16.msra.mxu0 0
        %551 = vmatprep.subr.bf16.mxu0 0
        %552 = vmatpush2.bf16.msra.mxu0 0
        %553 = vmatprep.subr.bf16.mxu0 0
        %554 = vmatpush2.bf16.msra.mxu0 0
        %555 = vmatprep.mubr.bf16.mxu0 0
        %556 = vmatmul.mubr.bf16.gmra.mxu0 %v518
        %v557 = vpop.f32.mrf.mxu0
        %v558 = vadd.f32 0.0, %v557
        %v559 = vpop.f32.mrf.mxu0
        %v560 = vpop.f32.mrf.mxu0
        %v561 = vpop.f32.mrf.mxu0
        %562 = vdwg.mxu0
        %v563 = vld [vmem:[#allocation2] sm:$0xf]
        %v565 = vunpack.c.l.b16 %v563
        %v566 = vpack.c.b16 %v565, %v565
        %567 = vrot.lane.b32.xlu0 %v566, 112
        %v568 = vpop.permute.xlu0 %567
        %569 = vrot.lane.b32.xlu0 %v566, 80
        %v570 = vpop.permute.xlu0 %569
        %v572 = vsel %vm336, %v568, 0
        %v575 = vsel %vm336, %v570, 0
        %577 = vmatprep.subr.bf16.mxu0 0
        %578 = vmatpush1.bf16.xpose.msra.mxu0 0
        %579 = vmatprep.subr.bf16.mxu0 0
        %580 = vmatpush1.bf16.xpose.msra.mxu0 0
        %581 = vmatprep.subr.bf16.mxu0 0
        %582 = vmatpush1.bf16.xpose.msra.mxu0 0
        %583 = vmatprep.subr.bf16.mxu0 0
        %584 = vmatpush1.bf16.xpose.msra.mxu0 0
        %585 = vmatprep.subr.bf16.mxu0 0
        %586 = vmatpush1.bf16.xpose.msra.mxu0 0
        %587 = vmatprep.subr.bf16.mxu0 0
        %588 = vmatpush1.bf16.xpose.msra.mxu0 0
        %589 = vmatprep.subr.bf16.mxu0 0
        %590 = vmatpush1.bf16.xpose.msra.mxu0 0
        %591 = vmatprep.subr.bf16.mxu0 0
        %592 = vmatpush1.bf16.xpose.msra.mxu0 %v575
        %593 = vmatprep.subr.bf16.mxu0 0
        %594 = vmatpush2.bf16.xpose.msra.mxu0 0
        %595 = vmatprep.subr.bf16.mxu0 0
        %596 = vmatpush2.bf16.xpose.msra.mxu0 0
        %597 = vmatprep.subr.bf16.mxu0 0
        %598 = vmatpush2.bf16.xpose.msra.mxu0 0
        %599 = vmatprep.subr.bf16.mxu0 0
        %600 = vmatpush2.bf16.xpose.msra.mxu0 0
        %601 = vmatprep.subr.bf16.mxu0 0
        %602 = vmatpush2.bf16.xpose.msra.mxu0 0
        %603 = vmatprep.subr.bf16.mxu0 0
        %604 = vmatpush2.bf16.xpose.msra.mxu0 0
        %605 = vmatprep.subr.bf16.mxu0 0
        %606 = vmatpush2.bf16.xpose.msra.mxu0 0
        %607 = vmatprep.subr.bf16.mxu0 0
        %608 = vmatpush2.bf16.xpose.msra.mxu0 0
        %609 = vmatprep.mubr.bf16.mxu0 0
        %610 = vmatmul.mubr.bf16.gmra.mxu0 %v572
        %v611 = vpop.f32.mrf.mxu0
        %v612 = vadd.f32 0.0, %v611
        %v613 = vpop.f32.mrf.mxu0
        %v614 = vpop.f32.mrf.mxu0
        %v615 = vpop.f32.mrf.mxu0
        %616 = vdwg.mxu0
        %v617 = vsel %vm336, %v612, -inf
        %618 = vmax.xlane.f32.xlu0 %v617
        %v619 = vpop.xlane.xlu0 %618
        %v620 = vsub.f32 %v612, %v619
        %v621 = vmul.f32 %v620, 1.442695
        %v622 = vpow.pop %v621
        %v623 = vsel %vm336, %v622, 0.0
        %624 = vadd.xlane.f32.xlu0 %v623
        %v625 = vpop.xlane.xlu0 %624
        %v626 = vrcp.pop %v625
        %v627 = vmul.f32 %v622, %v626
        %s628 = scalar_lea.vmem %s2, 16
        %v629 = vld [vmem:[%s628] sm:$0xff]
        %v630 = vadd.f32 %v627, %v629
        %v631 = vpack.c.bf16 %v630, %v630
        %632 = vrot.lane.b32.xlu0 %v566, 48
        %v633 = vpop.permute.xlu0 %632
        %v635 = vsel %vm336, %v631, 0
        %v638 = vsel %vm402, %v633, 0
        %640 = vmatprep.subr.bf16.mxu0 0
        %641 = vmatpush1.bf16.msra.mxu0 0
        %642 = vmatprep.subr.bf16.mxu0 0
        %643 = vmatpush1.bf16.msra.mxu0 0
        %644 = vmatprep.subr.bf16.mxu0 0
        %645 = vmatpush1.bf16.msra.mxu0 0
        %646 = vmatprep.subr.bf16.mxu0 0
        %647 = vmatpush1.bf16.msra.mxu0 0
        %648 = vmatprep.subr.bf16.mxu0 0
        %649 = vmatpush1.bf16.msra.mxu0 0
        %650 = vmatprep.subr.bf16.mxu0 0
        %651 = vmatpush1.bf16.msra.mxu0 0
        %652 = vmatprep.subr.bf16.mxu0 0
        %653 = vmatpush1.bf16.msra.mxu0 0
        %654 = vmatprep.subr.bf16.mxu0 0
        %655 = vmatpush1.bf16.msra.mxu0 %v638
        %656 = vmatprep.subr.bf16.mxu0 0
        %657 = vmatpush2.bf16.msra.mxu0 0
        %658 = vmatprep.subr.bf16.mxu0 0
        %659 = vmatpush2.bf16.msra.mxu0 0
        %660 = vmatprep.subr.bf16.mxu0 0
        %661 = vmatpush2.bf16.msra.mxu0 0
        %662 = vmatprep.subr.bf16.mxu0 0
        %663 = vmatpush2.bf16.msra.mxu0 0
        %664 = vmatprep.subr.bf16.mxu0 0
        %665 = vmatpush2.bf16.msra.mxu0 0
        %666 = vmatprep.subr.bf16.mxu0 0
        %667 = vmatpush2.bf16.msra.mxu0 0
        %668 = vmatprep.subr.bf16.mxu0 0
        %669 = vmatpush2.bf16.msra.mxu0 0
        %670 = vmatprep.subr.bf16.mxu0 0
        %671 = vmatpush2.bf16.msra.mxu0 0
        %672 = vmatprep.mubr.bf16.mxu0 0
        %673 = vmatmul.mubr.bf16.gmra.mxu0 %v635
        %v674 = vpop.f32.mrf.mxu0
        %v675 = vadd.f32 0.0, %v674
        %v676 = vpop.f32.mrf.mxu0
        %v677 = vpop.f32.mrf.mxu0
        %v678 = vpop.f32.mrf.mxu0
        %679 = vdwg.mxu0
        %v680 = vld [vmem:[#allocation2] sm:$0xf]
        %v682 = vunpack.c.l.b16 %v680
        %v683 = vpack.c.b16 %v682, %v682
        %684 = vrot.lane.b32.xlu0 %v683, 104
        %v685 = vpop.permute.xlu0 %684
        %686 = vrot.lane.b32.xlu0 %v683, 72
        %v687 = vpop.permute.xlu0 %686
        %v689 = vsel %vm336, %v685, 0
        %v692 = vsel %vm336, %v687, 0
        %694 = vmatprep.subr.bf16.mxu0 0
        %695 = vmatpush1.bf16.xpose.msra.mxu0 0
        %696 = vmatprep.subr.bf16.mxu0 0
        %697 = vmatpush1.bf16.xpose.msra.mxu0 0
        %698 = vmatprep.subr.bf16.mxu0 0
        %699 = vmatpush1.bf16.xpose.msra.mxu0 0
        %700 = vmatprep.subr.bf16.mxu0 0
        %701 = vmatpush1.bf16.xpose.msra.mxu0 0
        %702 = vmatprep.subr.bf16.mxu0 0
        %703 = vmatpush1.bf16.xpose.msra.mxu0 0
        %704 = vmatprep.subr.bf16.mxu0 0
        %705 = vmatpush1.bf16.xpose.msra.mxu0 0
        %706 = vmatprep.subr.bf16.mxu0 0
        %707 = vmatpush1.bf16.xpose.msra.mxu0 0
        %708 = vmatprep.subr.bf16.mxu0 0
        %709 = vmatpush1.bf16.xpose.msra.mxu0 %v692
        %710 = vmatprep.subr.bf16.mxu0 0
        %711 = vmatpush2.bf16.xpose.msra.mxu0 0
        %712 = vmatprep.subr.bf16.mxu0 0
        %713 = vmatpush2.bf16.xpose.msra.mxu0 0
        %714 = vmatprep.subr.bf16.mxu0 0
        %715 = vmatpush2.bf16.xpose.msra.mxu0 0
        %716 = vmatprep.subr.bf16.mxu0 0
        %717 = vmatpush2.bf16.xpose.msra.mxu0 0
        %718 = vmatprep.subr.bf16.mxu0 0
        %719 = vmatpush2.bf16.xpose.msra.mxu0 0
        %720 = vmatprep.subr.bf16.mxu0 0
        %721 = vmatpush2.bf16.xpose.msra.mxu0 0
        %722 = vmatprep.subr.bf16.mxu0 0
        %723 = vmatpush2.bf16.xpose.msra.mxu0 0
        %724 = vmatprep.subr.bf16.mxu0 0
        %725 = vmatpush2.bf16.xpose.msra.mxu0 0
        %726 = vmatprep.mubr.bf16.mxu0 0
        %727 = vmatmul.mubr.bf16.gmra.mxu0 %v689
        %v728 = vpop.f32.mrf.mxu0
        %v729 = vadd.f32 0.0, %v728
        %v730 = vpop.f32.mrf.mxu0
        %v731 = vpop.f32.mrf.mxu0
        %v732 = vpop.f32.mrf.mxu0
        %733 = vdwg.mxu0
        %v734 = vsel %vm336, %v729, -inf
        %735 = vmax.xlane.f32.xlu0 %v734
        %v736 = vpop.xlane.xlu0 %735
        %v737 = vsub.f32 %v729, %v736
        %v738 = vmul.f32 %v737, 1.442695
        %v739 = vpow.pop %v738
        %v740 = vsel %vm336, %v739, 0.0
        %741 = vadd.xlane.f32.xlu0 %v740
        %v742 = vpop.xlane.xlu0 %741
        %v743 = vrcp.pop %v742
        %v744 = vmul.f32 %v739, %v743
        %s745 = scalar_lea.vmem %s2, 24
        %v746 = vld [vmem:[%s745] sm:$0xff]
        %v747 = vadd.f32 %v744, %v746
        %v748 = vpack.c.bf16 %v747, %v747
        %749 = vrot.lane.b32.xlu0 %v683, 40
        %v750 = vpop.permute.xlu0 %749
        %v752 = vsel %vm336, %v748, 0
        %v755 = vsel %vm402, %v750, 0
        %757 = vmatprep.subr.bf16.mxu0 0
        %758 = vmatpush1.bf16.msra.mxu0 0
        %759 = vmatprep.subr.bf16.mxu0 0
        %760 = vmatpush1.bf16.msra.mxu0 0
        %761 = vmatprep.subr.bf16.mxu0 0
        %762 = vmatpush1.bf16.msra.mxu0 0
        %763 = vmatprep.subr.bf16.mxu0 0
        %764 = vmatpush1.bf16.msra.mxu0 0
        %765 = vmatprep.subr.bf16.mxu0 0
        %766 = vmatpush1.bf16.msra.mxu0 0
        %767 = vmatprep.subr.bf16.mxu0 0
        %768 = vmatpush1.bf16.msra.mxu0 0
        %769 = vmatprep.subr.bf16.mxu0 0
        %770 = vmatpush1.bf16.msra.mxu0 0
        %771 = vmatprep.subr.bf16.mxu0 0
        %772 = vmatpush1.bf16.msra.mxu0 %v755
        %773 = vmatprep.subr.bf16.mxu0 0
        %774 = vmatpush2.bf16.msra.mxu0 0
        %775 = vmatprep.subr.bf16.mxu0 0
        %776 = vmatpush2.bf16.msra.mxu0 0
        %777 = vmatprep.subr.bf16.mxu0 0
        %778 = vmatpush2.bf16.msra.mxu0 0
        %779 = vmatprep.subr.bf16.mxu0 0
        %780 = vmatpush2.bf16.msra.mxu0 0
        %781 = vmatprep.subr.bf16.mxu0 0
        %782 = vmatpush2.bf16.msra.mxu0 0
        %783 = vmatprep.subr.bf16.mxu0 0
        %784 = vmatpush2.bf16.msra.mxu0 0
        %785 = vmatprep.subr.bf16.mxu0 0
        %786 = vmatpush2.bf16.msra.mxu0 0
        %787 = vmatprep.subr.bf16.mxu0 0
        %788 = vmatpush2.bf16.msra.mxu0 0
        %789 = vmatprep.mubr.bf16.mxu0 0
        %790 = vmatmul.mubr.bf16.gmra.mxu0 %v752
        %v791 = vpop.f32.mrf.mxu0
        %v792 = vadd.f32 0.0, %v791
        %v793 = vpop.f32.mrf.mxu0
        %v794 = vpop.f32.mrf.mxu0
        %v795 = vpop.f32.mrf.mxu0
        %796 = vdwg.mxu0
        %798 = vrot.lane.b32.xlu0 %v558, 8
        %v799 = vpop.permute.xlu0 %798
        %802 = vrot.lane.b32.xlu0 %v675, 16
        %v803 = vpop.permute.xlu0 %802
        %806 = vrot.lane.b32.xlu0 %v792, 24
        %v807 = vpop.permute.xlu0 %806
        %v809 = vsel %vm336, %v441, %v799
        %vm810 = vcmask 130048
        %v811 = vsel %vm810, %v809, %v803
        %vm812 = vcmask 195584
        %v813 = vsel %vm812, %v811, %v807
        %v814 = vsel %vm265, %v813, 0.0
        %815 = vadd.xlane.f32.xlu0 %v814
        %v816 = vpop.xlane.xlu0 %815
        %v817 = vrcp.pop 32.0
        %v818 = vmul.f32 %v816, %v817
        %v819 = vmul.f32 %v813, %v813
        %v820 = vsel %vm265, %v819, 0.0
        %821 = vadd.xlane.f32.xlu0 %v820
        %v822 = vpop.xlane.xlu0 %821
        %v823 = vmul.f32 %v822, %v817
        %v824 = vmul.f32 %v818, %v818
        %v825 = vsub.f32 %v823, %v824
        %v826 = vsub.f32 %v813, %v818
        %v827 = vadd.f32 %v825, 1e-05
        %v828 = vrsqrt.pop %v827
        %v829 = vmul.f32 %v826, %v828
        %v830 = vld [vmem:[%s3] sm:$0x1]
        %v832 = vlaneseq
        %v833 = vshrl.u32 %v832, 7
        %v834 = vsub.s32 0, %v833
        %v835 = vrot.slane %v830, %v834
        %v837 = vmul.f32 %v829, %v835
        %v838 = vld [vmem:[%s4] sm:$0x1]
        %v840 = vlaneseq
        %v841 = vshrl.u32 %v840, 7
        %v842 = vsub.s32 0, %v841
        %v843 = vrot.slane %v838, %v842
        %v845 = vadd.f32 %v837, %v843
        %846 = vst.msk [vmem:[%s215] sm:$0xff] %vm265, %v845
        %s847 = sand.u32 %s137, 1
        %s848 = scalar_lea.sflag [#allocation4], %s847
        %s849 = sand.u32 %s137, 1
        %s850 = smul.addr %s849, 8
        %s851 = scalar_lea.vmem [#allocation3], %s850
        // Predicated region
        $region41: #{tpu_custom_call.1} parent=39 // pred_check
          %p852 = pneg %p147
        $region42: #{tpu_custom_call.1} parent=39 // pred_check_branch
          %854 = sbr.rel (%p852) target = $region44
        $region43: #{tpu_custom_call.1} parent=39 // pred_region
          %s856 = ssub.s32 128, 128
          %857 = vsyncadd %s848, %s856
          %s858 = smul.addr %s19, 128
          %s859 = scalar_lea.hbm %s5, %s858
          %s861 = sshll.u32 %s851, 4
          %s862 = int_to_ptr.vmem [resolvable:$true] %s861
          %864 = dma.vmem_to_hbm [thread:$0]  %s862, 128, %s859, %s848
        $region44: #{tpu_custom_call.1} parent=39 // pred_fallthru
          _
      $region40: #{tpu_custom_call.1} parent=5 // pred_fallthru
        _
      %p865 = scmp.le.s32.totalorder 2, %s14
      // Predicated region
      $region45: #{tpu_custom_call.1} parent=5 // pred_check
        %p866 = pneg %p865
      $region46: #{tpu_custom_call.1} parent=5 // pred_check_branch
        %868 = sbr.rel (%p866) target = $region48
      $region47: #{tpu_custom_call.1} parent=5 // pred_region
        %s869 = ssub.s32 %s14, 2
        // Predicated region
        $region49: #{tpu_custom_call.1} parent=47 // pred_check
          %p870 = pneg %p153
        $region50: #{tpu_custom_call.1} parent=47 // pred_check_branch
          %872 = sbr.rel (%p870) target = $region52
        $region51: #{tpu_custom_call.1} parent=47 // pred_region
          %s873 = sand.u32 %s138, 1
          %s874 = scalar_lea.sflag [#allocation4], %s873
          %s875 = sand.u32 %s138, 1
          %s876 = smul.addr %s875, 8
          %s877 = scalar_lea.vmem [#allocation3], %s876
          %878 = dma.done %s874, 128
        $region52: #{tpu_custom_call.1} parent=47 // pred_fallthru
          _
      $region48: #{tpu_custom_call.1} parent=5 // pred_fallthru
        _
    $region6: #{tpu_custom_call.1} parent=1 // loop_footer
      %s18 = sadd.s32 1, %s14
    $region7: #{tpu_custom_call.1} parent=1 // loop_footer_branch
      %13 = sbr.rel target = $region3
    $region8: #{tpu_custom_call.1} parent=1 // loop_exit
      _
    %879 = vsyncpa [#allocation4], 1
    %s880 = scalar_lea.sflag [#allocation4], 1
    %881 = vsyncpa %s880, 1

</llo_original>
